<compile_context>
chip_gen: v5e
topology: v5e:2x2
jax: 0.10.0
libtpu: 0.0.40
codegen_flags: <defaults>
</compile_context>

<pallas_src>
import math

import jax
import jax.numpy as jnp
from jax.experimental import pallas as pl
from jax.experimental.pallas import tpu as pltpu


def _round_up(x: int, m: int) -> int:
    return ((x + m - 1) // m) * m


# ---------------------------------------------------------------------------
# Stage 1: effective_W = relu(u) - relu(v)   (elementwise, tiled)
# ---------------------------------------------------------------------------
def effective_w_kernel(u_ref, v_ref, w_ref):
    w_ref[...] = jnp.maximum(u_ref[...], 0.0) - jnp.maximum(v_ref[...], 0.0)


# ---------------------------------------------------------------------------
# Stage 2: y = x @ W + bias   (M/N/K tiled, f32 accumulator)
# ---------------------------------------------------------------------------
def matmul_bias_kernel(x_ref, w_ref, b_ref, o_ref, acc_ref):
    @pl.when(pl.program_id(2) == 0)
    def _():
        acc_ref[...] = jnp.zeros_like(acc_ref)

    acc_ref[...] += jnp.dot(
        x_ref[...], w_ref[...], preferred_element_type=jnp.float32
    )

    @pl.when(pl.program_id(2) == pl.num_programs(2) - 1)
    def _():
        # Bias added exactly once, at the final K step.
        o_ref[...] = (acc_ref[...] + b_ref[...]).astype(o_ref.dtype)


def lasso_linear_forward(x, u_param, v_param, bias, *, tm=128, tn=512, tk=512):
    """x: [B, insize]  u/v: [insize, outsize]  bias: [1, outsize] -> [B, outsize]"""
    B, insize = x.shape
    insize2, outsize = u_param.shape
    assert insize == insize2 and bias.shape == (1, outsize)

    # Clamp tiles to the (aligned) problem size.
    tm = min(tm, _round_up(B, 8))
    tn = min(tn, _round_up(outsize, 128))
    tk = min(tk, _round_up(insize, 128))

    M = _round_up(B, tm)
    N = _round_up(outsize, tn)
    K = _round_up(insize, tk)

    # Lane/sublane-dense padding (zero pad on K is exact for the matmul;
    # relu(0) - relu(0) == 0 so padded W is exactly zero).
    x_p = jnp.pad(x, ((0, M - B), (0, K - insize)))
    u_p = jnp.pad(u_param, ((0, K - insize), (0, N - outsize)))
    v_p = jnp.pad(v_param, ((0, K - insize), (0, N - outsize)))
    b_p = jnp.pad(bias, ((0, 0), (0, N - outsize)))

    # --- Stage 1: hoisted effective_W (reads u and v exactly once) ---------
    w_p = pl.pallas_call(
        effective_w_kernel,
        out_shape=jax.ShapeDtypeStruct((K, N), jnp.float32),
        grid=(K // tk, N // tn),
        in_specs=[
            pl.BlockSpec((tk, tn), lambda i, j: (i, j)),
            pl.BlockSpec((tk, tn), lambda i, j: (i, j)),
        ],
        out_specs=pl.BlockSpec((tk, tn), lambda i, j: (i, j)),
        compiler_params=pltpu.CompilerParams(
            dimension_semantics=("parallel", "parallel")
        ),
    )(u_p, v_p)

    # --- Stage 2: tiled matmul + bias ---------------------------------------
    y_p = pl.pallas_call(
        matmul_bias_kernel,
        out_shape=jax.ShapeDtypeStruct((M, N), jnp.float32),
        grid_spec=pltpu.PrefetchScalarGridSpec(
            num_scalar_prefetch=0,
            grid=(M // tm, N // tn, K // tk),
            in_specs=[
                pl.BlockSpec((tm, tk), lambda i, j, k: (i, k)),   # x tile
                pl.BlockSpec((tk, tn), lambda i, j, k: (k, j)),   # W tile
                pl.BlockSpec((1, tn), lambda i, j, k: (0, j)),    # bias tile
            ],
            out_specs=pl.BlockSpec((tm, tn), lambda i, j, k: (i, j)),
            scratch_shapes=[pltpu.VMEM((tm, tn), jnp.float32)],
        ),
        compiler_params=pltpu.CompilerParams(
            dimension_semantics=("parallel", "parallel", "arbitrary")
        ),
    )(x_p, w_p, b_p)

    return y_p[:B, :outsize]


def init_lasso_linear_params(key, insize, outsize, use_bias=False):
    """Deterministic parameter init mirroring LassoLinear.__init__ shapes.
       u_param = |kaiming_normal| / 2 ; v_param likewise ; bias zeros (bias=False)."""
    ku, kv, kb = jax.random.split(key, 3)
    # kaiming_normal_ (fan_in = second dim for a 2D tensor in torch.nn.init)
    std = math.sqrt(2.0) / math.sqrt(outsize)
    u = jnp.abs(jax.random.normal(ku, (insize, outsize), jnp.float32) * std) / 2.0
    v = jnp.abs(jax.random.normal(kv, (insize, outsize), jnp.float32) * std) / 2.0
    if use_bias:
        bound = 1.0 / math.sqrt(insize)
        bias = jax.random.uniform(kb, (1, outsize), jnp.float32, -bound, bound)
    else:
        bias = jnp.zeros((1, outsize), jnp.float32)
    return u, v, bias


if __name__ == "__main__":
    key = jax.random.PRNGKey(0)
    kx, kp = jax.random.split(key)

    batch, insize, outsize = 8, 32, 16
    x = jax.random.normal(kx, (batch, insize), jnp.float32)
    u_param, v_param, bias = init_lasso_linear_params(kp, insize, outsize, use_bias=False)

    y = lasso_linear_forward(x, u_param, v_param, bias)
    y = jax.block_until_ready(y)

    # Reference check in plain JAX.
    w_ref = jnp.maximum(u_param, 0.0) - jnp.maximum(v_param, 0.0)
    y_ref = x @ w_ref + bias
    assert y.shape == (batch, outsize)
    assert jnp.allclose(y, y_ref, atol=1e-5, rtol=1e-5), "mismatch vs reference"

    print("KERNEL_OK")
</pallas_src>

<mosaic_0001>
module attributes {stable_mosaic.version = 11 : i64} {
  func.func @effective_w_kernel(%arg0: i32, %arg1: i32, %arg2: memref<128x128xf32, #tpu.memory_space<vmem>>, %arg3: memref<128x128xf32, #tpu.memory_space<vmem>>, %arg4: memref<128x128xf32, #tpu.memory_space<vmem>>) attributes {dimension_semantics = [#tpu.dimension_semantics<parallel>, #tpu.dimension_semantics<parallel>], iteration_bounds = array<i64: 1, 1>, scalar_prefetch = 0 : i64, scratch_operands = 0 : i64, tpu.core_type = #tpu.core_type<tc>, window_params = [{transform_indices = @transform_0, window_bounds = array<i64: 128, 128>}, {transform_indices = @transform_1, window_bounds = array<i64: 128, 128>}, {transform_indices = @transform_2, window_bounds = array<i64: 128, 128>}]} {
    %c0 = arith.constant 0 : index
    %c0_0 = arith.constant 0 : index
    %0 = vector.load %arg2[%c0, %c0_0] : memref<128x128xf32, #tpu.memory_space<vmem>>, vector<128x128xf32>
    %cst = arith.constant 0.000000e+00 : f32
    %1 = vector.broadcast %cst : f32 to vector<128x128xf32>
    %2 = arith.maximumf %0, %1 : vector<128x128xf32>
    %c0_1 = arith.constant 0 : index
    %c0_2 = arith.constant 0 : index
    %3 = vector.load %arg3[%c0_1, %c0_2] : memref<128x128xf32, #tpu.memory_space<vmem>>, vector<128x128xf32>
    %cst_3 = arith.constant 0.000000e+00 : f32
    %4 = vector.broadcast %cst_3 : f32 to vector<128x128xf32>
    %5 = arith.maximumf %3, %4 : vector<128x128xf32>
    %6 = arith.subf %2, %5 : vector<128x128xf32>
    %c0_4 = arith.constant 0 : index
    %c0_5 = arith.constant 0 : index
    %7 = vector.load %arg4[%c0_4, %c0_5] : memref<128x128xf32, #tpu.memory_space<vmem>>, vector<128x128xf32>
    tpu.vector_store %arg4[%c0_4, %c0_5], %6 {strides = array<i32>} : memref<128x128xf32, #tpu.memory_space<vmem>>, vector<128x128xf32>,
    return
  }
  func.func @transform_0(%arg0: i32, %arg1: i32) -> (i32, i32) {
    %c0_i32 = arith.constant 0 : i32
    return %arg0, %arg1 : i32, i32
  }
  func.func @transform_1(%arg0: i32, %arg1: i32) -> (i32, i32) {
    %c0_i32 = arith.constant 0 : i32
    return %arg0, %arg1 : i32, i32
  }
  func.func @transform_2(%arg0: i32, %arg1: i32) -> (i32, i32) {
    %c0_i32 = arith.constant 0 : i32
    return %arg0, %arg1 : i32, i32
  }
}

</mosaic_0001>

<llo_original>
// kernel: tpu_custom_call.1
$region0: #{tpu_custom_call.1}
  #allocation0 [shape = 'u32[]', space=smem, size = 0x4, offset = 0x4, fixed_abs, tag = 'smem constant byte address 0x4 - core index']
  #allocation1 [shape = 'u32[72,128]{1,0:T(1,128)}', space=vmem, size = 0x9000, scoped, tag = 'internal scratch']
  %s0 = inlined_call_operand.hbm [shape: f32[128,128], index: 0, kind: input, shape index: {}]
  %s1 = inlined_call_operand.hbm [shape: f32[128,128], index: 1, kind: input, shape index: {}]
  %s2 = inlined_call_operand.hbm [shape: f32[128,128], index: 2, kind: output, shape index: {}]
  %s3 = sld [smem:[#allocation0]]
  $region26: #{tpu_custom_call.1} parent=0
    _
  %s5 = ssub.s32 1, %s3
  %s6 = scalar_select 0, %s5, %s3
  $region1: #{tpu_custom_call.1} parent=0
    #allocation2 [shape = 'u8[65536]{0}', space=vmem, size = 0x10000, scoped, tag = 'input window, operand 0, single buffered']
    #allocation3 [shape = 's32[1]{0}', space=sflag, size = 0x4, scoped, tag = 'scoped memory for tpu_custom_call.1']
    #allocation4 [shape = 's32[1]{0}', space=sflag, size = 0x4, scoped, tag = 'scoped memory for tpu_custom_call.1']
    #allocation5 [shape = 'u8[65536]{0}', space=vmem, size = 0x10000, scoped, tag = 'input window, operand 1, single buffered']
    #allocation6 [shape = 's32[1]{0}', space=sflag, size = 0x4, scoped, tag = 'scoped memory for tpu_custom_call.1']
    #allocation7 [shape = 'u8[65536]{0}', space=vmem, size = 0x10000, scoped, tag = 'output window, operand 0, single buffered']
    %7 = vsyncpa [#allocation3], 0
    %8 = vsyncpa [#allocation6], 0
    %9 = vsyncpa [#allocation4], 0
    // Predicated region
    $region2: #{tpu_custom_call.1} parent=1 // pred_check
      _
    $region3: #{tpu_custom_call.1} parent=1 // pred_check_branch
      %11 = sbr.rel (0) target = $region5
    $region4: #{tpu_custom_call.1} parent=1 // pred_region
      %13 = vsyncadd [#allocation3], 0
      %s14 = sshll.u32 %s0, 4
      %s15 = int_to_ptr.hbm [resolvable:$true] %s14
      %s16 = sshll.u32 [#allocation2], 4
      %s17 = int_to_ptr.vmem [resolvable:$true] %s16
      %22 = dma.hbm_to_vmem [thread:$0]  %s15, 2048, %s17, [#allocation3], 128, 128, 8
    $region5: #{tpu_custom_call.1} parent=1 // pred_fallthru
      _
    // Predicated region
    $region6: #{tpu_custom_call.1} parent=1 // pred_check
      _
    $region7: #{tpu_custom_call.1} parent=1 // pred_check_branch
      %24 = sbr.rel (0) target = $region9
    $region8: #{tpu_custom_call.1} parent=1 // pred_region
      %26 = vsyncadd [#allocation6], 0
      %s27 = sshll.u32 %s1, 4
      %s28 = int_to_ptr.hbm [resolvable:$true] %s27
      %s29 = sshll.u32 [#allocation5], 4
      %s30 = int_to_ptr.vmem [resolvable:$true] %s29
      %35 = dma.hbm_to_vmem [thread:$0]  %s28, 2048, %s30, [#allocation6], 128, 128, 8
    $region9: #{tpu_custom_call.1} parent=1 // pred_fallthru
      _
    // Predicated region
    $region10: #{tpu_custom_call.1} parent=1 // pred_check
      _
    $region11: #{tpu_custom_call.1} parent=1 // pred_check_branch
      %37 = sbr.rel (0) target = $region13
    $region12: #{tpu_custom_call.1} parent=1 // pred_region
      %39 = dma.done [#allocation3], 2048
    $region13: #{tpu_custom_call.1} parent=1 // pred_fallthru
      _
    // Predicated region
    $region14: #{tpu_custom_call.1} parent=1 // pred_check
      _
    $region15: #{tpu_custom_call.1} parent=1 // pred_check_branch
      %41 = sbr.rel (0) target = $region17
    $region16: #{tpu_custom_call.1} parent=1 // pred_region
      %43 = dma.done [#allocation6], 2048
    $region17: #{tpu_custom_call.1} parent=1 // pred_fallthru
      _
    %v44 = vld [vmem:[#allocation2] sm:$0xff]
    %v45 = vld [vmem:[#allocation2 + $0x8] sm:$0xff]
    %v46 = vld [vmem:[#allocation2 + $0x10] sm:$0xff]
    %v47 = vld [vmem:[#allocation2 + $0x18] sm:$0xff]
    %v48 = vld [vmem:[#allocation2 + $0x20] sm:$0xff]
    %v49 = vld [vmem:[#allocation2 + $0x28] sm:$0xff]
    %v50 = vld [vmem:[#allocation2 + $0x30] sm:$0xff]
    %v51 = vld [vmem:[#allocation2 + $0x38] sm:$0xff]
    %v52 = vld [vmem:[#allocation2 + $0x40] sm:$0xff]
    %v53 = vld [vmem:[#allocation2 + $0x48] sm:$0xff]
    %v54 = vld [vmem:[#allocation2 + $0x50] sm:$0xff]
    %v55 = vld [vmem:[#allocation2 + $0x58] sm:$0xff]
    %v56 = vld [vmem:[#allocation2 + $0x60] sm:$0xff]
    %v57 = vld [vmem:[#allocation2 + $0x68] sm:$0xff]
    %v58 = vld [vmem:[#allocation2 + $0x70] sm:$0xff]
    %v59 = vld [vmem:[#allocation2 + $0x78] sm:$0xff]
    %v60 = vmax.f32 %v44, 0.0
    %v61 = vmax.f32 %v45, 0.0
    %v62 = vmax.f32 %v46, 0.0
    %v63 = vmax.f32 %v47, 0.0
    %v64 = vmax.f32 %v48, 0.0
    %v65 = vmax.f32 %v49, 0.0
    %v66 = vmax.f32 %v50, 0.0
    %v67 = vmax.f32 %v51, 0.0
    %v68 = vmax.f32 %v52, 0.0
    %v69 = vmax.f32 %v53, 0.0
    %v70 = vmax.f32 %v54, 0.0
    %v71 = vmax.f32 %v55, 0.0
    %v72 = vmax.f32 %v56, 0.0
    %v73 = vmax.f32 %v57, 0.0
    %v74 = vmax.f32 %v58, 0.0
    %v75 = vmax.f32 %v59, 0.0
    %v76 = vld [vmem:[#allocation5] sm:$0xff]
    %v77 = vld [vmem:[#allocation5 + $0x8] sm:$0xff]
    %v78 = vld [vmem:[#allocation5 + $0x10] sm:$0xff]
    %v79 = vld [vmem:[#allocation5 + $0x18] sm:$0xff]
    %v80 = vld [vmem:[#allocation5 + $0x20] sm:$0xff]
    %v81 = vld [vmem:[#allocation5 + $0x28] sm:$0xff]
    %v82 = vld [vmem:[#allocation5 + $0x30] sm:$0xff]
    %v83 = vld [vmem:[#allocation5 + $0x38] sm:$0xff]
    %v84 = vld [vmem:[#allocation5 + $0x40] sm:$0xff]
    %v85 = vld [vmem:[#allocation5 + $0x48] sm:$0xff]
    %v86 = vld [vmem:[#allocation5 + $0x50] sm:$0xff]
    %v87 = vld [vmem:[#allocation5 + $0x58] sm:$0xff]
    %v88 = vld [vmem:[#allocation5 + $0x60] sm:$0xff]
    %v89 = vld [vmem:[#allocation5 + $0x68] sm:$0xff]
    %v90 = vld [vmem:[#allocation5 + $0x70] sm:$0xff]
    %v91 = vld [vmem:[#allocation5 + $0x78] sm:$0xff]
    %v92 = vmax.f32 %v76, 0.0
    %v93 = vmax.f32 %v77, 0.0
    %v94 = vmax.f32 %v78, 0.0
    %v95 = vmax.f32 %v79, 0.0
    %v96 = vmax.f32 %v80, 0.0
    %v97 = vmax.f32 %v81, 0.0
    %v98 = vmax.f32 %v82, 0.0
    %v99 = vmax.f32 %v83, 0.0
    %v100 = vmax.f32 %v84, 0.0
    %v101 = vmax.f32 %v85, 0.0
    %v102 = vmax.f32 %v86, 0.0
    %v103 = vmax.f32 %v87, 0.0
    %v104 = vmax.f32 %v88, 0.0
    %v105 = vmax.f32 %v89, 0.0
    %v106 = vmax.f32 %v90, 0.0
    %v107 = vmax.f32 %v91, 0.0
    %v108 = vsub.f32 %v60, %v92
    %v109 = vsub.f32 %v61, %v93
    %v110 = vsub.f32 %v62, %v94
    %v111 = vsub.f32 %v63, %v95
    %v112 = vsub.f32 %v64, %v96
    %v113 = vsub.f32 %v65, %v97
    %v114 = vsub.f32 %v66, %v98
    %v115 = vsub.f32 %v67, %v99
    %v116 = vsub.f32 %v68, %v100
    %v117 = vsub.f32 %v69, %v101
    %v118 = vsub.f32 %v70, %v102
    %v119 = vsub.f32 %v71, %v103
    %v120 = vsub.f32 %v72, %v104
    %v121 = vsub.f32 %v73, %v105
    %v122 = vsub.f32 %v74, %v106
    %v123 = vsub.f32 %v75, %v107
    %124 = vst [vmem:[#allocation7] sm:$0xff] %v108
    %125 = vst [vmem:[#allocation7 + $0x8] sm:$0xff] %v109
    %126 = vst [vmem:[#allocation7 + $0x10] sm:$0xff] %v110
    %127 = vst [vmem:[#allocation7 + $0x18] sm:$0xff] %v111
    %128 = vst [vmem:[#allocation7 + $0x20] sm:$0xff] %v112
    %129 = vst [vmem:[#allocation7 + $0x28] sm:$0xff] %v113
    %130 = vst [vmem:[#allocation7 + $0x30] sm:$0xff] %v114
    %131 = vst [vmem:[#allocation7 + $0x38] sm:$0xff] %v115
    %132 = vst [vmem:[#allocation7 + $0x40] sm:$0xff] %v116
    %133 = vst [vmem:[#allocation7 + $0x48] sm:$0xff] %v117
    %134 = vst [vmem:[#allocation7 + $0x50] sm:$0xff] %v118
    %135 = vst [vmem:[#allocation7 + $0x58] sm:$0xff] %v119
    %136 = vst [vmem:[#allocation7 + $0x60] sm:$0xff] %v120
    %137 = vst [vmem:[#allocation7 + $0x68] sm:$0xff] %v121
    %138 = vst [vmem:[#allocation7 + $0x70] sm:$0xff] %v122
    %139 = vst [vmem:[#allocation7 + $0x78] sm:$0xff] %v123
    // Predicated region
    $region18: #{tpu_custom_call.1} parent=1 // pred_check
      _
    $region19: #{tpu_custom_call.1} parent=1 // pred_check_branch
      %141 = sbr.rel (0) target = $region21
    $region20: #{tpu_custom_call.1} parent=1 // pred_region
      %143 = vsyncadd [#allocation4], 0
      %s144 = sshll.u32 [#allocation7], 4
      %s145 = int_to_ptr.vmem [resolvable:$true] %s144
      %s146 = sshll.u32 %s2, 4
      %s147 = int_to_ptr.hbm [resolvable:$true] %s146
      %152 = dma.vmem_to_hbm [thread:$0]  %s145, 2048, %s147, [#allocation4], 128, 128, 8
    $region21: #{tpu_custom_call.1} parent=1 // pred_fallthru
      _
    // Predicated region
    $region22: #{tpu_custom_call.1} parent=1 // pred_check
      _
    $region23: #{tpu_custom_call.1} parent=1 // pred_check_branch
      %154 = sbr.rel (0) target = $region25
    $region24: #{tpu_custom_call.1} parent=1 // pred_region
      %156 = dma.done [#allocation4], 2048
    $region25: #{tpu_custom_call.1} parent=1 // pred_fallthru
      _
    %157 = vsyncpa [#allocation3], 1
    %158 = vsyncpa [#allocation6], 1
    %159 = vsyncpa [#allocation4], 1

</llo_original>
